<compile_context>
chip_gen: v6e
topology: v6e:2x2x1
jax: 0.10.0
libtpu: 0.0.40
codegen_flags: <defaults>
</compile_context>

<pallas_src>
import jax
import jax.numpy as jnp
from jax.experimental import pallas as pl
from jax.experimental.pallas import tpu as pltpu

DIS_NEGSLOPE = 0.1
_LANE = 128


def _round_up(n, m):
    return ((n + m - 1) // m) * m


def _discriminator_kernel(x_ref, w1_ref, b1_ref, w2_ref, b2_ref, o_ref):
    # x_ref : (K_pad, TB)    bf16  -- features x batch-tile (batch on lanes), pipelined
    # w1_ref: (H_pad, K_pad) bf16  -- W1^T, VMEM-resident across tiles
    # b1_ref: (H_pad, 1)     f32
    # w2_ref: (H_pad, 1)     f32
    # b2_ref: (1, 1)         f32 in SMEM (scalar)
    # o_ref : (1, TB)        f32   -- lane-dense output row
    # Layer 1 on the MXU with f32 accumulation: h = W1^T @ x^T -> (H_pad, TB)
    h = jnp.dot(w1_ref[...], x_ref[...], preferred_element_type=jnp.float32)
    h = h + b1_ref[...]                              # lane-broadcast bias column
    h = jnp.where(h >= 0, h, DIS_NEGSLOPE * h)       # LeakyReLU(0.1), f32 on VPU
    # Layer 2 (output width 1): VPU multiply + sublane reduction (no N=1 matmul).
    z = jnp.sum(h * w2_ref[...], axis=0, keepdims=True)   # (1, TB)
    z = z + b2_ref[0, 0]
    # Sigmoid: exp on EUP, approximate reciprocal on EUP (keeps VALU slots free).
    o_ref[...] = pl.reciprocal(1.0 + jnp.exp(-z), approx=True).astype(o_ref.dtype)


def discriminator_forward(x, w1, b1, w2, b2, *, batch_tile=128):
    """x: (B, in_features); w1: (in, hidden); b1: (hidden,); w2: (hidden, 1);
    b2: (1,). Returns (B, 1) float32 = sigmoid(leaky_relu(x@W1+b1, 0.1)@W2 + b2)."""
    B, in_features = x.shape
    hidden = w1.shape[1]

    # Lane-aligned tile / padded sizes (TB multiple of 128; sweep 512/1024/2048 for
    # large batches, keeping the double-buffered x tile under the scoped VMEM limit).
    TB = max(_LANE, _round_up(min(batch_tile, _round_up(B, _LANE)), _LANE))
    B_pad = _round_up(B, TB)
    K_pad = _round_up(in_features, _LANE)
    H_pad = _round_up(hidden, _LANE)

    # Wrapper-side layout plumbing (free): zero-pad and transpose so batch -> lanes.
    x_t = jnp.zeros((K_pad, B_pad), jnp.bfloat16).at[:in_features, :B].set(
        x.astype(jnp.bfloat16).T)
    w1_t = jnp.zeros((H_pad, K_pad), jnp.bfloat16).at[:hidden, :in_features].set(
        w1.astype(jnp.bfloat16).T)
    b1_c = jnp.zeros((H_pad, 1), jnp.float32).at[:hidden, 0].set(
        b1.reshape(-1).astype(jnp.float32))
    w2_c = jnp.zeros((H_pad, 1), jnp.float32).at[:hidden, 0].set(
        w2.reshape(-1).astype(jnp.float32))
    b2_s = b2.reshape(1, 1).astype(jnp.float32)

    n_tiles = B_pad // TB

    out = pl.pallas_call(
        _discriminator_kernel,
        out_shape=jax.ShapeDtypeStruct((1, B_pad), jnp.float32),
        grid_spec=pltpu.PrefetchScalarGridSpec(
            num_scalar_prefetch=0,
            grid=(n_tiles,),
            in_specs=[
                pl.BlockSpec((K_pad, TB), lambda i: (0, i)),        # x tile (pipelined)
                pl.BlockSpec((H_pad, K_pad), lambda i: (0, 0)),     # W1^T (resident)
                pl.BlockSpec((H_pad, 1), lambda i: (0, 0)),         # b1  (resident)
                pl.BlockSpec((H_pad, 1), lambda i: (0, 0)),         # w2  (resident)
                pl.BlockSpec(memory_space=pltpu.MemorySpace.SMEM),  # b2 scalar
            ],
            out_specs=pl.BlockSpec((1, TB), lambda i: (0, i)),      # lane-dense output
        ),
        compiler_params=pltpu.CompilerParams(
            dimension_semantics=("parallel",),   # shard batch tiles across TCs (v7x)
        ),
    )(x_t, w1_t, b1_c, w2_c, b2_s)

    return out[0, :B].reshape(B, 1)


def init_params(key, in_features, hidden_features):
    """Deterministic init mimicking nn.Linear's uniform(-1/sqrt(fan_in), 1/sqrt(fan_in)).
    Weights stored as [in, out] (transpose of PyTorch's [out, in])."""
    k1, k2, k3, k4 = jax.random.split(key, 4)
    bound1 = 1.0 / jnp.sqrt(in_features)
    bound2 = 1.0 / jnp.sqrt(hidden_features)
    w1 = jax.random.uniform(k1, (in_features, hidden_features),
                            minval=-bound1, maxval=bound1, dtype=jnp.float32)
    b1 = jax.random.uniform(k2, (hidden_features,),
                            minval=-bound1, maxval=bound1, dtype=jnp.float32)
    w2 = jax.random.uniform(k3, (hidden_features, 1),
                            minval=-bound2, maxval=bound2, dtype=jnp.float32)
    b2 = jax.random.uniform(k4, (1,),
                            minval=-bound2, maxval=bound2, dtype=jnp.float32)
    return w1, b1, w2, b2


def reference_forward(x, w1, b1, w2, b2):
    # Same bf16 cast on the matmul inputs as the kernel, f32 everywhere else.
    h = jnp.dot(x.astype(jnp.bfloat16), w1.astype(jnp.bfloat16),
                preferred_element_type=jnp.float32) + b1
    h = jnp.where(h >= 0, h, DIS_NEGSLOPE * h)
    z = h @ w2 + b2
    return jax.nn.sigmoid(z)


if __name__ == "__main__":
    batch = 256
    in_features = 64
    hidden_features = 32

    key = jax.random.PRNGKey(0)
    kx, kp = jax.random.split(key)
    x = jax.random.normal(kx, (batch, in_features), dtype=jnp.float32)
    w1, b1, w2, b2 = init_params(kp, in_features, hidden_features)

    out = discriminator_forward(x, w1, b1, w2, b2, batch_tile=128)
    out = jax.block_until_ready(out)

    ref = reference_forward(x, w1, b1, w2, b2)
    assert out.shape == (batch, 1), out.shape
    assert bool(jnp.allclose(out, ref, atol=2e-3, rtol=2e-3)), (
        float(jnp.max(jnp.abs(out - ref))))

    print("KERNEL_OK")
</pallas_src>

<mosaic_0001>
module attributes {stable_mosaic.version = 11 : i64} {
  func.func @_discriminator_kernel(%arg0: i32, %arg1: memref<128x128xbf16, #tpu.memory_space<vmem>>, %arg2: memref<128x128xbf16, #tpu.memory_space<vmem>>, %arg3: memref<128x1xf32, #tpu.memory_space<vmem>>, %arg4: memref<128x1xf32, #tpu.memory_space<vmem>>, %arg5: memref<1x1xf32, #tpu.memory_space<smem>>, %arg6: memref<1x128xf32, #tpu.memory_space<vmem>>) attributes {dimension_semantics = [#tpu.dimension_semantics<parallel>], iteration_bounds = array<i64: 2>, scalar_prefetch = 0 : i64, scratch_operands = 0 : i64, tpu.core_type = #tpu.core_type<tc>, window_params = [{transform_indices = @transform_0, window_bounds = array<i64: 128, 128>}, {pipeline_mode = #tpu.pipeline_mode<synchronous>, transform_indices = @transform_1, window_bounds = array<i64: 128, 128>}, {pipeline_mode = #tpu.pipeline_mode<synchronous>, transform_indices = @transform_2, window_bounds = array<i64: 128, 1>}, {pipeline_mode = #tpu.pipeline_mode<synchronous>, transform_indices = @transform_3, window_bounds = array<i64: 128, 1>}, {transform_indices = @transform_4, window_bounds = array<i64: 1, 1>}, {transform_indices = @transform_5, window_bounds = array<i64: 1, 128>}]} {
    %c0 = arith.constant 0 : index
    %c0_0 = arith.constant 0 : index
    %0 = vector.load %arg2[%c0, %c0_0] : memref<128x128xbf16, #tpu.memory_space<vmem>>, vector<128x128xbf16>
    %c0_1 = arith.constant 0 : index
    %c0_2 = arith.constant 0 : index
    %1 = vector.load %arg1[%c0_1, %c0_2] : memref<128x128xbf16, #tpu.memory_space<vmem>>, vector<128x128xbf16>
    %cst = arith.constant dense<0.000000e+00> : vector<128x128xf32>
    %2 = tpu.matmul %0, %1, %cst {dimension_numbers = #tpu.dot_dimension_numbers<[1], [0], [0], [1], [0, 0, 1, 1], [], []>} : vector<128x128xbf16>, vector<128x128xbf16>, vector<128x128xf32> -> vector<128x128xf32>
    %c0_3 = arith.constant 0 : index
    %c0_4 = arith.constant 0 : index
    %3 = vector.load %arg3[%c0_3, %c0_4] : memref<128x1xf32, #tpu.memory_space<vmem>>, vector<128x1xf32>
    %4 = vector.broadcast %3 : vector<128x1xf32> to vector<128x128xf32>
    %5 = arith.addf %2, %4 : vector<128x128xf32>
    %cst_5 = arith.constant 0.000000e+00 : f32
    %6 = vector.broadcast %cst_5 : f32 to vector<128x128xf32>
    %7 = arith.cmpf oge, %5, %6 : vector<128x128xf32>
    %cst_6 = arith.constant 1.000000e-01 : f32
    %8 = vector.broadcast %cst_6 : f32 to vector<128x128xf32>
    %9 = arith.mulf %8, %5 : vector<128x128xf32>
    %10 = arith.select %7, %5, %9 : vector<128x128xi1>, vector<128x128xf32>
    %c0_7 = arith.constant 0 : index
    %c0_8 = arith.constant 0 : index
    %11 = vector.load %arg4[%c0_7, %c0_8] : memref<128x1xf32, #tpu.memory_space<vmem>>, vector<128x1xf32>
    %12 = vector.broadcast %11 : vector<128x1xf32> to vector<128x128xf32>
    %13 = arith.mulf %10, %12 : vector<128x128xf32>
    %cst_9 = arith.constant dense<0.000000e+00> : vector<128xf32>
    %14 = vector.multi_reduction <add>, %13, %cst_9 [0] : vector<128x128xf32> to vector<128xf32>
    %15 = vector.shape_cast %14 : vector<128xf32> to vector<1x128xf32>
    %c0_10 = arith.constant 0 : index
    %c0_11 = arith.constant 0 : index
    %16 = memref.load %arg5[%c0_10, %c0_11] : memref<1x1xf32, #tpu.memory_space<smem>>
    %17 = vector.broadcast %16 : f32 to vector<1x128xf32>
    %18 = arith.addf %15, %17 : vector<1x128xf32>
    %cst_12 = arith.constant 0.000000e+00 : f32
    %19 = vector.broadcast %cst_12 : f32 to vector<1x128xf32>
    %20 = arith.subf %19, %18 : vector<1x128xf32>
    %21 = math.exp %20 : vector<1x128xf32>
    %cst_13 = arith.constant 1.000000e+00 : f32
    %22 = vector.broadcast %cst_13 : f32 to vector<1x128xf32>
    %23 = arith.addf %22, %21 : vector<1x128xf32>
    %24 = tpu.reciprocal %23 {approx = true} : vector<1x128xf32> -> vector<1x128xf32>
    %c0_14 = arith.constant 0 : index
    %c0_15 = arith.constant 0 : index
    %25 = vector.load %arg6[%c0_14, %c0_15] : memref<1x128xf32, #tpu.memory_space<vmem>>, vector<1x128xf32>
    tpu.vector_store %arg6[%c0_14, %c0_15], %24 {strides = array<i32>} : memref<1x128xf32, #tpu.memory_space<vmem>>, vector<1x128xf32>,
    return
  }
  func.func @transform_0(%arg0: i32) -> (i32, i32) {
    %c0_i32 = arith.constant 0 : i32
    %c0_i32_0 = arith.constant 0 : i32
    return %c0_i32, %arg0 : i32, i32
  }
  func.func @transform_1(%arg0: i32) -> (i32, i32) {
    %c0_i32 = arith.constant 0 : i32
    %c0_i32_0 = arith.constant 0 : i32
    %c0_i32_1 = arith.constant 0 : i32
    return %c0_i32, %c0_i32_0 : i32, i32
  }
  func.func @transform_2(%arg0: i32) -> (i32, i32) {
    %c0_i32 = arith.constant 0 : i32
    %c0_i32_0 = arith.constant 0 : i32
    %c0_i32_1 = arith.constant 0 : i32
    return %c0_i32, %c0_i32_0 : i32, i32
  }
  func.func @transform_3(%arg0: i32) -> (i32, i32) {
    %c0_i32 = arith.constant 0 : i32
    %c0_i32_0 = arith.constant 0 : i32
    %c0_i32_1 = arith.constant 0 : i32
    return %c0_i32, %c0_i32_0 : i32, i32
  }
  func.func @transform_4(%arg0: i32) -> (i32, i32) {
    %c0_i32 = arith.constant 0 : i32
    %c0_i32_0 = arith.constant 0 : i32
    %c0_i32_1 = arith.constant 0 : i32
    return %c0_i32, %c0_i32_0 : i32, i32
  }
  func.func @transform_5(%arg0: i32) -> (i32, i32) {
    %c0_i32 = arith.constant 0 : i32
    %c0_i32_0 = arith.constant 0 : i32
    return %c0_i32, %arg0 : i32, i32
  }
}

</mosaic_0001>

<llo_original>
// kernel: tpu_custom_call.1
$region0: #{tpu_custom_call.1}
  #allocation0 [shape = 'u32[]', space=smem, size = 0x4, offset = 0x4, fixed_abs, tag = 'smem constant byte address 0x4 - core index']
  #allocation1 [shape = 'u32[144,128]{1,0:T(1,128)}', space=vmem, size = 0x12000, scoped, tag = 'internal scratch']
  #allocation2 [shape = 'f32[1,1]{1,0:T(1,128)S(6)}', space=smem, size = 0x200, scoped, tag = 'scoped memory for tpu_custom_call.1']
  %s0 = inlined_call_operand.vmem [shape: bf16[128,256], index: 0, kind: input, shape index: {}]
  %s1 = inlined_call_operand.vmem [shape: bf16[128,128], index: 1, kind: input, shape index: {}]
  %s2 = inlined_call_operand.vmem [shape: f32[128,1], index: 2, kind: input, shape index: {}]
  %s3 = inlined_call_operand.vmem [shape: f32[128,1], index: 3, kind: input, shape index: {}]
  %s4 = inlined_call_operand.<no memory space> [shape: f32[1,1], index: 4, kind: input, shape index: {}]
  %s5 = inlined_call_operand.hbm [shape: f32[1,256], index: 5, kind: output, shape index: {}]
  %s6 = sld [smem:[#allocation0]]
  $region94: #{tpu_custom_call.1} parent=0
    _
  %s8 = ssub.s32 1, %s6
  %s9 = scalar_select 0, %s8, %s6
  %10 = sst [smem:[#allocation2]] %s4
  $region1: #{tpu_custom_call.1} parent=0
    #allocation3 [shape = 'u8[65536]{0}', space=vmem, size = 0x10000, scoped, tag = 'input window, operand 0']
    #allocation4 [shape = 'u8[1024]{0}', space=vmem, size = 0x400, scoped, tag = 'output window, operand 0']
    #allocation5 [shape = 's32[2]{0}', space=sflag, size = 0x8, scoped, tag = 'scoped memory for tpu_custom_call.1']
    %11 = vsyncpa [#allocation5], 0
    %s12 = scalar_lea.sflag [#allocation5], 1
    %13 = vsyncpa %s12, 0
    loop: start=0, step=1, limit=4
    $region2: #{tpu_custom_call.1} parent=1 // loop_pre_header
      _
    $region3: #{tpu_custom_call.1} parent=1 // loop_header
      %s15 = sphi 0, %s19
      %p16 = scmp.ge.s32.totalorder %s15, 4
      %s25 = sphi 0, %s27
      %s28 = sphi 0, %s25
      %s29 = sphi 0, %s28
      %s45 = sphi 0, %s29
      %s49 = sphi 0, %s49
      %s51 = sphi 0, %s49
      %s52 = sphi 0, %s51
      %s66 = sphi 0, %s52
      %s70 = sphi 0, %s70
      %s72 = sphi 0, %s70
      %s73 = sphi 0, %s72
      %s87 = sphi 0, %s73
      %s91 = sphi 0, %s91
      %s93 = sphi 0, %s91
      %s94 = sphi 0, %s93
      %s108 = sphi 0, %s94
      %s112 = sphi 0, %s112
      %s114 = sphi 0, %s112
      %s115 = sphi 0, %s114
      %s129 = sphi 0, %s115
      %s135 = sphi 0, %s137
      %s138 = sphi 0, %s135
      %s139 = sphi 0, %s138
      %s155 = sphi 0, %s139
    $region4: #{tpu_custom_call.1} parent=1 // loop_header_branch
      %18 = sbr.rel (%p16) target = $region8
    $region5: #{tpu_custom_call.1} parent=1 // loop_body
      %s20 = ssub.s32 %s15, 1
      %s21 = ssub.s32 %s15, 2
      %s22 = sadd.s32 %s15, 1
      %s23 = ssub.s32 %s15, %s22
      %p24 = scmp.eq.s32.totalorder %s23, 0
      %s26 = sadd.s32 %s25, 1
      %s27 = scalar_select %p24, %s25, %s26
      %p30 = pneg %p24
      %p31 = scmp.eq.s32.totalorder %s15, 1
      %p32 = por %p30, %p31
      %p33 = scmp.ne.s32.totalorder %s25, %s28
      %p34 = scmp.eq.s32.totalorder %s15, 0
      %p35 = por %p33, %p34
      %p36 = scmp.ne.s32.totalorder %s25, %s28
      %p37 = scmp.eq.s32.totalorder %s20, 1
      %p38 = por %p36, %p37
      %p39 = scmp.ne.s32.totalorder %s28, %s29
      %p40 = scmp.eq.s32.totalorder %s20, 0
      %p41 = por %p39, %p40
      %p42 = scmp.ne.s32.totalorder %s28, %s29
      %p43 = scmp.eq.s32.totalorder %s21, 1
      %p44 = por %p42, %p43
      %p46 = scmp.ne.s32.totalorder %s29, %s45
      %p47 = scmp.eq.s32.totalorder %s21, 0
      %p48 = por %p46, %p47
      %s50 = sadd.s32 %s49, 1
      %p53 = scmp.eq.s32.totalorder %s15, 1
      %p54 = scmp.ne.s32.totalorder %s49, %s51
      %p55 = scmp.eq.s32.totalorder %s15, 0
      %p56 = por %p54, %p55
      %p57 = scmp.ne.s32.totalorder %s49, %s51
      %p58 = scmp.eq.s32.totalorder %s20, 1
      %p59 = por %p57, %p58
      %p60 = scmp.ne.s32.totalorder %s51, %s52
      %p61 = scmp.eq.s32.totalorder %s20, 0
      %p62 = por %p60, %p61
      %p63 = scmp.ne.s32.totalorder %s51, %s52
      %p64 = scmp.eq.s32.totalorder %s21, 1
      %p65 = por %p63, %p64
      %p67 = scmp.ne.s32.totalorder %s52, %s66
      %p68 = scmp.eq.s32.totalorder %s21, 0
      %p69 = por %p67, %p68
      %s71 = sadd.s32 %s70, 1
      %p74 = scmp.eq.s32.totalorder %s15, 1
      %p75 = scmp.ne.s32.totalorder %s70, %s72
      %p76 = scmp.eq.s32.totalorder %s15, 0
      %p77 = por %p75, %p76
      %p78 = scmp.ne.s32.totalorder %s70, %s72
      %p79 = scmp.eq.s32.totalorder %s20, 1
      %p80 = por %p78, %p79
      %p81 = scmp.ne.s32.totalorder %s72, %s73
      %p82 = scmp.eq.s32.totalorder %s20, 0
      %p83 = por %p81, %p82
      %p84 = scmp.ne.s32.totalorder %s72, %s73
      %p85 = scmp.eq.s32.totalorder %s21, 1
      %p86 = por %p84, %p85
      %p88 = scmp.ne.s32.totalorder %s73, %s87
      %p89 = scmp.eq.s32.totalorder %s21, 0
      %p90 = por %p88, %p89
      %s92 = sadd.s32 %s91, 1
      %p95 = scmp.eq.s32.totalorder %s15, 1
      %p96 = scmp.ne.s32.totalorder %s91, %s93
      %p97 = scmp.eq.s32.totalorder %s15, 0
      %p98 = por %p96, %p97
      %p99 = scmp.ne.s32.totalorder %s91, %s93
      %p100 = scmp.eq.s32.totalorder %s20, 1
      %p101 = por %p99, %p100
      %p102 = scmp.ne.s32.totalorder %s93, %s94
      %p103 = scmp.eq.s32.totalorder %s20, 0
      %p104 = por %p102, %p103
      %p105 = scmp.ne.s32.totalorder %s93, %s94
      %p106 = scmp.eq.s32.totalorder %s21, 1
      %p107 = por %p105, %p106
      %p109 = scmp.ne.s32.totalorder %s94, %s108
      %p110 = scmp.eq.s32.totalorder %s21, 0
      %p111 = por %p109, %p110
      %s113 = sadd.s32 %s112, 1
      %p116 = scmp.eq.s32.totalorder %s15, 1
      %p117 = scmp.ne.s32.totalorder %s112, %s114
      %p118 = scmp.eq.s32.totalorder %s15, 0
      %p119 = por %p117, %p118
      %p120 = scmp.ne.s32.totalorder %s112, %s114
      %p121 = scmp.eq.s32.totalorder %s20, 1
      %p122 = por %p120, %p121
      %p123 = scmp.ne.s32.totalorder %s114, %s115
      %p124 = scmp.eq.s32.totalorder %s20, 0
      %p125 = por %p123, %p124
      %p126 = scmp.ne.s32.totalorder %s114, %s115
      %p127 = scmp.eq.s32.totalorder %s21, 1
      %p128 = por %p126, %p127
      %p130 = scmp.ne.s32.totalorder %s115, %s129
      %p131 = scmp.eq.s32.totalorder %s21, 0
      %p132 = por %p130, %p131
      %s133 = ssub.s32 %s15, %s22
      %p134 = scmp.eq.s32.totalorder %s133, 0
      %s136 = sadd.s32 %s135, 1
      %s137 = scalar_select %p134, %s135, %s136
      %p140 = pneg %p134
      %p141 = scmp.eq.s32.totalorder %s15, 1
      %p142 = por %p140, %p141
      %p143 = scmp.ne.s32.totalorder %s135, %s138
      %p144 = scmp.eq.s32.totalorder %s15, 0
      %p145 = por %p143, %p144
      %p146 = scmp.ne.s32.totalorder %s135, %s138
      %p147 = scmp.eq.s32.totalorder %s20, 1
      %p148 = por %p146, %p147
      %p149 = scmp.ne.s32.totalorder %s138, %s139
      %p150 = scmp.eq.s32.totalorder %s20, 0
      %p151 = por %p149, %p150
      %p152 = scmp.ne.s32.totalorder %s138, %s139
      %p153 = scmp.eq.s32.totalorder %s21, 1
      %p154 = por %p152, %p153
      %p156 = scmp.ne.s32.totalorder %s139, %s155
      %p157 = scmp.eq.s32.totalorder %s21, 0
      %p158 = por %p156, %p157
      %p159 = scmp.le.s32.totalorder 1, %s15
      %p160 = scmp.lt.s32.totalorder %s15, 3
      %p161 = pnand %p159, %p160
      %p162 = pneg %p161
      // Predicated region
      $region9: #{tpu_custom_call.1} parent=5 // pred_check
        _
      $region10: #{tpu_custom_call.1} parent=5 // pred_check_branch
        %164 = sbr.rel (%p161) target = $region12
      $region11: #{tpu_custom_call.1} parent=5 // pred_region
        %s165 = ssub.s32 %s15, 1
        // Predicated region
        $region13: #{tpu_custom_call.1} parent=11 // pred_check
          %p166 = pneg %p62
        $region14: #{tpu_custom_call.1} parent=11 // pred_check_branch
          %168 = sbr.rel (%p166) target = $region16
        $region15: #{tpu_custom_call.1} parent=11 // pred_region
          _
        $region16: #{tpu_custom_call.1} parent=11 // pred_fallthru
          _
        // Predicated region
        $region17: #{tpu_custom_call.1} parent=11 // pred_check
          %p169 = pneg %p83
        $region18: #{tpu_custom_call.1} parent=11 // pred_check_branch
          %171 = sbr.rel (%p169) target = $region20
        $region19: #{tpu_custom_call.1} parent=11 // pred_region
          _
        $region20: #{tpu_custom_call.1} parent=11 // pred_fallthru
          _
        // Predicated region
        $region21: #{tpu_custom_call.1} parent=11 // pred_check
          %p172 = pneg %p104
        $region22: #{tpu_custom_call.1} parent=11 // pred_check_branch
          %174 = sbr.rel (%p172) target = $region24
        $region23: #{tpu_custom_call.1} parent=11 // pred_region
          _
        $region24: #{tpu_custom_call.1} parent=11 // pred_fallthru
          _
        // Predicated region
        $region25: #{tpu_custom_call.1} parent=11 // pred_check
          %p175 = pneg %p125
        $region26: #{tpu_custom_call.1} parent=11 // pred_check_branch
          %177 = sbr.rel (%p175) target = $region28
        $region27: #{tpu_custom_call.1} parent=11 // pred_region
          _
        $region28: #{tpu_custom_call.1} parent=11 // pred_fallthru
          _
      $region12: #{tpu_custom_call.1} parent=5 // pred_fallthru
        _
      %p178 = scmp.lt.s32.totalorder %s15, 2
      // Predicated region
      $region29: #{tpu_custom_call.1} parent=5 // pred_check
        %p179 = pneg %p178
      $region30: #{tpu_custom_call.1} parent=5 // pred_check_branch
        %181 = sbr.rel (%p179) target = $region32
      $region31: #{tpu_custom_call.1} parent=5 // pred_region
        // Predicated region
        $region33: #{tpu_custom_call.1} parent=31 // pred_check
          %p182 = pneg %p35
        $region34: #{tpu_custom_call.1} parent=31 // pred_check_branch
          %184 = sbr.rel (%p182) target = $region36
        $region35: #{tpu_custom_call.1} parent=31 // pred_region
          %s185 = sand.u32 %s25, 1
          %s186 = sand.u32 %s25, 1
          %s187 = smul.addr %s186, 64
          %s188 = scalar_lea.vmem [#allocation3], %s187
          %s189 = smul.addr %s15, 4
          %s190 = scalar_lea.vmem %s0, %s189
          // Predicated region
          $region37: #{tpu_custom_call.1} parent=35 // pred_check
            _
          $region38: #{tpu_custom_call.1} parent=35 // pred_check_branch
            %192 = sbr.rel (0) target = $region40
          $region39: #{tpu_custom_call.1} parent=35 // pred_region
            // Predicated region
            $region41: #{tpu_custom_call.1} parent=39 // pred_check
              _
            $region42: #{tpu_custom_call.1} parent=39 // pred_check_branch
              %194 = sbr.rel target = $region44
            $region43: #{tpu_custom_call.1} parent=39 // pred_region
              // Predicated region
              $region56: #{tpu_custom_call.1} parent=43 // pred_check
                _
              $region57: #{tpu_custom_call.1} parent=43 // pred_check_branch
                %240 = sbr.rel (0) target = $region59
              $region58: #{tpu_custom_call.1} parent=43 // pred_region
                loop: start=0, step=1, limit=1
                $region60: #{tpu_custom_call.1} parent=58 // loop_pre_header
                  _
                $region61: #{tpu_custom_call.1} parent=58 // loop_header
                  %s242 = sphi 0, %s246
                  %p243 = scmp.ge.s32.totalorder %s242, 1
                  %s247 = sphi %s190, %s190
                  %s248 = sphi %s188, %s188
                $region62: #{tpu_custom_call.1} parent=58 // loop_header_branch
                  %245 = sbr.rel (%p243) target = $region66
                $region63: #{tpu_custom_call.1} parent=58 // loop_body
                  _
                $region64: #{tpu_custom_call.1} parent=58 // loop_footer
                  %s246 = sadd.s32 1, %s242
                $region65: #{tpu_custom_call.1} parent=58 // loop_footer_branch
                  %241 = sbr.rel target = $region61
                $region66: #{tpu_custom_call.1} parent=58 // loop_exit
                  _
                %s250 = ssub.s32 16, 1
                loop: start=0, step=1, limit=1
                $region67: #{tpu_custom_call.1} parent=58 // loop_pre_header
                  _
                $region68: #{tpu_custom_call.1} parent=58 // loop_header
                  %s252 = sphi 0, %s256
                  %p253 = scmp.ge.s32.totalorder %s252, 1
                  %s257 = sphi %s190, %s190
                  %s258 = sphi %s188, %s188
                $region69: #{tpu_custom_call.1} parent=58 // loop_header_branch
                  %255 = sbr.rel (%p253) target = $region73
                $region70: #{tpu_custom_call.1} parent=58 // loop_body
                  %v259 = vld [vmem:[%s257] sm:%s250]
                  %260 = vst [vmem:[%s258] sm:%s250] %v259
                  %v261 = vld [vmem:[%s257 + $0x8] sm:%s250]
                  %262 = vst [vmem:[%s258 + $0x4] sm:%s250] %v261
                  %v263 = vld [vmem:[%s257 + $0x10] sm:%s250]
                  %264 = vst [vmem:[%s258 + $0x8] sm:%s250] %v263
                  %v265 = vld [vmem:[%s257 + $0x18] sm:%s250]
                  %266 = vst [vmem:[%s258 + $0xc] sm:%s250] %v265
                  %v267 = vld [vmem:[%s257 + $0x20] sm:%s250]
                  %268 = vst [vmem:[%s258 + $0x10] sm:%s250] %v267
                  %v269 = vld [vmem:[%s257 + $0x28] sm:%s250]
                  %270 = vst [vmem:[%s258 + $0x14] sm:%s250] %v269
                  %v271 = vld [vmem:[%s257 + $0x30] sm:%s250]
                  %272 = vst [vmem:[%s258 + $0x18] sm:%s250] %v271
                  %v273 = vld [vmem:[%s257 + $0x38] sm:%s250]
                  %274 = vst [vmem:[%s258 + $0x1c] sm:%s250] %v273
                  %v275 = vld [vmem:[%s257 + $0x40] sm:%s250]
                  %276 = vst [vmem:[%s258 + $0x20] sm:%s250] %v275
                  %v277 = vld [vmem:[%s257 + $0x48] sm:%s250]
                  %278 = vst [vmem:[%s258 + $0x24] sm:%s250] %v277
                  %v279 = vld [vmem:[%s257 + $0x50] sm:%s250]
                  %280 = vst [vmem:[%s258 + $0x28] sm:%s250] %v279
                  %v281 = vld [vmem:[%s257 + $0x58] sm:%s250]
                  %282 = vst [vmem:[%s258 + $0x2c] sm:%s250] %v281
                  %v283 = vld [vmem:[%s257 + $0x60] sm:%s250]
                  %284 = vst [vmem:[%s258 + $0x30] sm:%s250] %v283
                  %v285 = vld [vmem:[%s257 + $0x68] sm:%s250]
                  %286 = vst [vmem:[%s258 + $0x34] sm:%s250] %v285
                  %v287 = vld [vmem:[%s257 + $0x70] sm:%s250]
                  %288 = vst [vmem:[%s258 + $0x38] sm:%s250] %v287
                  %v289 = vld [vmem:[%s257 + $0x78] sm:%s250]
                  %290 = vst [vmem:[%s258 + $0x3c] sm:%s250] %v289
                $region71: #{tpu_custom_call.1} parent=58 // loop_footer
                  %s256 = sadd.s32 1, %s252
                $region72: #{tpu_custom_call.1} parent=58 // loop_footer_branch
                  %251 = sbr.rel target = $region68
                $region73: #{tpu_custom_call.1} parent=58 // loop_exit
                  _
              $region59: #{tpu_custom_call.1} parent=43 // pred_fallthru
                _
            $region44: #{tpu_custom_call.1} parent=39 // pred_fallthru
              _
            // Predicated region
            $region45: #{tpu_custom_call.1} parent=39 // pred_check
              _
            $region46: #{tpu_custom_call.1} parent=39 // pred_check_branch
              %196 = sbr.rel (0) target = $region48
            $region47: #{tpu_custom_call.1} parent=39 // pred_region
              %s198 = ssub.s32 16, 1
              loop: start=0, step=1, limit=1
              $region49: #{tpu_custom_call.1} parent=47 // loop_pre_header
                _
              $region50: #{tpu_custom_call.1} parent=47 // loop_header
                %s200 = sphi 0, %s204
                %p201 = scmp.ge.s32.totalorder %s200, 1
                %s205 = sphi %s190, %s190
                %s206 = sphi %s188, %s188
              $region51: #{tpu_custom_call.1} parent=47 // loop_header_branch
                %203 = sbr.rel (%p201) target = $region55
              $region52: #{tpu_custom_call.1} parent=47 // loop_body
                %v207 = vld [vmem:[%s205] sm:%s198]
                %208 = vst [vmem:[%s206] sm:%s198] %v207
                %v209 = vld [vmem:[%s205 + $0x8] sm:%s198]
                %210 = vst [vmem:[%s206 + $0x4] sm:%s198] %v209
                %v211 = vld [vmem:[%s205 + $0x10] sm:%s198]
                %212 = vst [vmem:[%s206 + $0x8] sm:%s198] %v211
                %v213 = vld [vmem:[%s205 + $0x18] sm:%s198]
                %214 = vst [vmem:[%s206 + $0xc] sm:%s198] %v213
                %v215 = vld [vmem:[%s205 + $0x20] sm:%s198]
                %216 = vst [vmem:[%s206 + $0x10] sm:%s198] %v215
                %v217 = vld [vmem:[%s205 + $0x28] sm:%s198]
                %218 = vst [vmem:[%s206 + $0x14] sm:%s198] %v217
                %v219 = vld [vmem:[%s205 + $0x30] sm:%s198]
                %220 = vst [vmem:[%s206 + $0x18] sm:%s198] %v219
                %v221 = vld [vmem:[%s205 + $0x38] sm:%s198]
                %222 = vst [vmem:[%s206 + $0x1c] sm:%s198] %v221
                %v223 = vld [vmem:[%s205 + $0x40] sm:%s198]
                %224 = vst [vmem:[%s206 + $0x20] sm:%s198] %v223
                %v225 = vld [vmem:[%s205 + $0x48] sm:%s198]
                %226 = vst [vmem:[%s206 + $0x24] sm:%s198] %v225
                %v227 = vld [vmem:[%s205 + $0x50] sm:%s198]
                %228 = vst [vmem:[%s206 + $0x28] sm:%s198] %v227
                %v229 = vld [vmem:[%s205 + $0x58] sm:%s198]
                %230 = vst [vmem:[%s206 + $0x2c] sm:%s198] %v229
                %v231 = vld [vmem:[%s205 + $0x60] sm:%s198]
                %232 = vst [vmem:[%s206 + $0x30] sm:%s198] %v231
                %v233 = vld [vmem:[%s205 + $0x68] sm:%s198]
                %234 = vst [vmem:[%s206 + $0x34] sm:%s198] %v233
                %v235 = vld [vmem:[%s205 + $0x70] sm:%s198]
                %236 = vst [vmem:[%s206 + $0x38] sm:%s198] %v235
                %v237 = vld [vmem:[%s205 + $0x78] sm:%s198]
                %238 = vst [vmem:[%s206 + $0x3c] sm:%s198] %v237
              $region53: #{tpu_custom_call.1} parent=47 // loop_footer
                %s204 = sadd.s32 1, %s200
              $region54: #{tpu_custom_call.1} parent=47 // loop_footer_branch
                %199 = sbr.rel target = $region50
              $region55: #{tpu_custom_call.1} parent=47 // loop_exit
                _
            $region48: #{tpu_custom_call.1} parent=39 // pred_fallthru
              _
          $region40: #{tpu_custom_call.1} parent=35 // pred_fallthru
            _
          %291 = vnop
        $region36: #{tpu_custom_call.1} parent=31 // pred_fallthru
          _
      $region32: #{tpu_custom_call.1} parent=5 // pred_fallthru
        _
      %p292 = scmp.le.s32.totalorder 1, %s15
      %p293 = scmp.lt.s32.totalorder %s15, 3
      %p294 = pnand %p292, %p293
      %p295 = pneg %p294
      // Predicated region
      $region74: #{tpu_custom_call.1} parent=5 // pred_check
        _
      $region75: #{tpu_custom_call.1} parent=5 // pred_check_branch
        %297 = sbr.rel (%p294) target = $region77
      $region76: #{tpu_custom_call.1} parent=5 // pred_region
        %s298 = ssub.s32 %s15, 1
        %s299 = sand.u32 %s28, 1
        %s300 = sand.u32 %s28, 1
        %s301 = smul.addr %s300, 64
        %s302 = scalar_lea.vmem [#allocation3], %s301
        // Predicated region
        $region78: #{tpu_custom_call.1} parent=76 // pred_check
          %p303 = pneg %p41
        $region79: #{tpu_custom_call.1} parent=76 // pred_check_branch
          %305 = sbr.rel (%p303) target = $region81
        $region80: #{tpu_custom_call.1} parent=76 // pred_region
          _
        $region81: #{tpu_custom_call.1} parent=76 // pred_fallthru
          _
        %s306 = sand.u32 %s28, 1
        %s307 = sand.u32 %s28, 1
        %s308 = smul.addr %s307, 64
        %s309 = scalar_lea.vmem [#allocation3], %s308
        %p310 = pneg %p41
        %p311 = pneg %p38
        %p312 = pneg %p62
        %p313 = pneg %p59
        %p314 = pneg %p83
        %p315 = pneg %p80
        %p316 = pneg %p104
        %p317 = pneg %p101
        %p318 = pneg %p125
        %p319 = pneg %p122
        %p320 = pneg %p151
        %p321 = pneg %p148
        %s322 = sand.u32 %s138, 1
        %s323 = scalar_lea.sflag [#allocation5], %s322
        %s324 = sand.u32 %s138, 1
        %s325 = scalar_lea.vmem [#allocation4], %s324
        %v327 = vld [vmem:[%s1] sm:$0xf]
        %v328 = vld [vmem:[%s1 + $0x4] sm:$0xf]
        %v329 = vld [vmem:[%s1 + $0x8] sm:$0xf]
        %v330 = vld [vmem:[%s1 + $0xc] sm:$0xf]
        %v331 = vld [vmem:[%s1 + $0x10] sm:$0xf]
        %v332 = vld [vmem:[%s1 + $0x14] sm:$0xf]
        %v333 = vld [vmem:[%s1 + $0x18] sm:$0xf]
        %v334 = vld [vmem:[%s1 + $0x1c] sm:$0xf]
        %v335 = vld [vmem:[%s1 + $0x20] sm:$0xf]
        %v336 = vld [vmem:[%s1 + $0x24] sm:$0xf]
        %v337 = vld [vmem:[%s1 + $0x28] sm:$0xf]
        %v338 = vld [vmem:[%s1 + $0x2c] sm:$0xf]
        %v339 = vld [vmem:[%s1 + $0x30] sm:$0xf]
        %v340 = vld [vmem:[%s1 + $0x34] sm:$0xf]
        %v341 = vld [vmem:[%s1 + $0x38] sm:$0xf]
        %v342 = vld [vmem:[%s1 + $0x3c] sm:$0xf]
        %v343 = vld [vmem:[%s302] sm:$0xf]
        %v344 = vld [vmem:[%s302 + $0x4] sm:$0xf]
        %v345 = vld [vmem:[%s302 + $0x8] sm:$0xf]
        %v346 = vld [vmem:[%s302 + $0xc] sm:$0xf]
        %v347 = vld [vmem:[%s302 + $0x10] sm:$0xf]
        %v348 = vld [vmem:[%s302 + $0x14] sm:$0xf]
        %v349 = vld [vmem:[%s302 + $0x18] sm:$0xf]
        %v350 = vld [vmem:[%s302 + $0x1c] sm:$0xf]
        %v351 = vld [vmem:[%s302 + $0x20] sm:$0xf]
        %v352 = vld [vmem:[%s302 + $0x24] sm:$0xf]
        %v353 = vld [vmem:[%s302 + $0x28] sm:$0xf]
        %v354 = vld [vmem:[%s302 + $0x2c] sm:$0xf]
        %v355 = vld [vmem:[%s302 + $0x30] sm:$0xf]
        %v356 = vld [vmem:[%s302 + $0x34] sm:$0xf]
        %v357 = vld [vmem:[%s302 + $0x38] sm:$0xf]
        %v358 = vld [vmem:[%s302 + $0x3c] sm:$0xf]
        %v359 = vld [vmem:[%s2] sm:$0xff]
        %v360 = vld [vmem:[%s2 + $0x8] sm:$0xff]
        %v361 = vld [vmem:[%s2 + $0x10] sm:$0xff]
        %v362 = vld [vmem:[%s2 + $0x18] sm:$0xff]
        %v363 = vld [vmem:[%s2 + $0x20] sm:$0xff]
        %v364 = vld [vmem:[%s2 + $0x28] sm:$0xff]
        %v365 = vld [vmem:[%s2 + $0x30] sm:$0xff]
        %v366 = vld [vmem:[%s2 + $0x38] sm:$0xff]
        %v367 = vld [vmem:[%s2 + $0x40] sm:$0xff]
        %v368 = vld [vmem:[%s2 + $0x48] sm:$0xff]
        %v369 = vld [vmem:[%s2 + $0x50] sm:$0xff]
        %v370 = vld [vmem:[%s2 + $0x58] sm:$0xff]
        %v371 = vld [vmem:[%s2 + $0x60] sm:$0xff]
        %v372 = vld [vmem:[%s2 + $0x68] sm:$0xff]
        %v373 = vld [vmem:[%s2 + $0x70] sm:$0xff]
        %v374 = vld [vmem:[%s2 + $0x78] sm:$0xff]
        %376 = vset.pattern.permute.xlu0 0
        %377 = vperm.xlu0 %376, %v359
        %v378 = vpop.permute.xlu0 %377
        %381 = vset.pattern.permute.xlu0 0
        %382 = vperm.xlu0 %381, %v360
        %v383 = vpop.permute.xlu0 %382
        %386 = vset.pattern.permute.xlu0 0
        %387 = vperm.xlu0 %386, %v361
        %v388 = vpop.permute.xlu0 %387
        %391 = vset.pattern.permute.xlu0 0
        %392 = vperm.xlu0 %391, %v362
        %v393 = vpop.permute.xlu0 %392
        %396 = vset.pattern.permute.xlu0 0
        %397 = vperm.xlu0 %396, %v363
        %v398 = vpop.permute.xlu0 %397
        %401 = vset.pattern.permute.xlu0 0
        %402 = vperm.xlu0 %401, %v364
        %v403 = vpop.permute.xlu0 %402
        %406 = vset.pattern.permute.xlu0 0
        %407 = vperm.xlu0 %406, %v365
        %v408 = vpop.permute.xlu0 %407
        %411 = vset.pattern.permute.xlu0 0
        %412 = vperm.xlu0 %411, %v366
        %v413 = vpop.permute.xlu0 %412
        %416 = vset.pattern.permute.xlu0 0
        %417 = vperm.xlu0 %416, %v367
        %v418 = vpop.permute.xlu0 %417
        %421 = vset.pattern.permute.xlu0 0
        %422 = vperm.xlu0 %421, %v368
        %v423 = vpop.permute.xlu0 %422
        %426 = vset.pattern.permute.xlu0 0
        %427 = vperm.xlu0 %426, %v369
        %v428 = vpop.permute.xlu0 %427
        %431 = vset.pattern.permute.xlu0 0
        %432 = vperm.xlu0 %431, %v370
        %v433 = vpop.permute.xlu0 %432
        %436 = vset.pattern.permute.xlu0 0
        %437 = vperm.xlu0 %436, %v371
        %v438 = vpop.permute.xlu0 %437
        %441 = vset.pattern.permute.xlu0 0
        %442 = vperm.xlu0 %441, %v372
        %v443 = vpop.permute.xlu0 %442
        %446 = vset.pattern.permute.xlu0 0
        %447 = vperm.xlu0 %446, %v373
        %v448 = vpop.permute.xlu0 %447
        %451 = vset.pattern.permute.xlu0 0
        %452 = vperm.xlu0 %451, %v374
        %v453 = vpop.permute.xlu0 %452
        %v471 = vunpack.c.l.b16 %v327
        %v472 = vunpack.c.l.b16 %v328
        %v473 = vunpack.c.l.b16 %v329
        %v474 = vunpack.c.l.b16 %v330
        %v475 = vunpack.c.l.b16 %v331
        %v476 = vunpack.c.l.b16 %v332
        %v477 = vunpack.c.l.b16 %v333
        %v478 = vunpack.c.l.b16 %v334
        %v479 = vunpack.c.l.b16 %v335
        %v480 = vunpack.c.l.b16 %v336
        %v481 = vunpack.c.l.b16 %v337
        %v482 = vunpack.c.l.b16 %v338
        %v483 = vunpack.c.l.b16 %v339
        %v484 = vunpack.c.l.b16 %v340
        %v485 = vunpack.c.l.b16 %v341
        %v486 = vunpack.c.l.b16 %v342
        %v487 = vpack.c.b16 %v472, %v471
        %v488 = vpack.c.b16 %v474, %v473
        %v489 = vpack.c.b16 %v476, %v475
        %v490 = vpack.c.b16 %v478, %v477
        %v491 = vpack.c.b16 %v480, %v479
        %v492 = vpack.c.b16 %v482, %v481
        %v493 = vpack.c.b16 %v484, %v483
        %v494 = vpack.c.b16 %v486, %v485
        %v519 = vunpack.c.l.b16 %v343
        %v520 = vunpack.c.l.b16 %v344
        %v521 = vunpack.c.l.b16 %v345
        %v522 = vunpack.c.l.b16 %v346
        %v523 = vunpack.c.l.b16 %v347
        %v524 = vunpack.c.l.b16 %v348
        %v525 = vunpack.c.l.b16 %v349
        %v526 = vunpack.c.l.b16 %v350
        %v527 = vunpack.c.l.b16 %v351
        %v528 = vunpack.c.l.b16 %v352
        %v529 = vunpack.c.l.b16 %v353
        %v530 = vunpack.c.l.b16 %v354
        %v531 = vunpack.c.l.b16 %v355
        %v532 = vunpack.c.l.b16 %v356
        %v533 = vunpack.c.l.b16 %v357
        %v534 = vunpack.c.l.b16 %v358
        %v535 = vpack.c.b16 %v520, %v519
        %v536 = vpack.c.b16 %v522, %v521
        %v537 = vpack.c.b16 %v524, %v523
        %v538 = vpack.c.b16 %v526, %v525
        %v539 = vpack.c.b16 %v528, %v527
        %v540 = vpack.c.b16 %v530, %v529
        %v541 = vpack.c.b16 %v532, %v531
        %v542 = vpack.c.b16 %v534, %v533
        %551 = vmatprep.subr.bf16.mxu0 0
        %552 = vmatpush1.bf16.msra.mxu0 %v542
        %553 = vmatprep.subr.bf16.mxu0 0
        %554 = vmatpush1.bf16.msra.mxu0 %v541
        %555 = vmatprep.subr.bf16.mxu0 0
        %556 = vmatpush1.bf16.msra.mxu0 %v540
        %557 = vmatprep.subr.bf16.mxu0 0
        %558 = vmatpush1.bf16.msra.mxu0 %v539
        %559 = vmatprep.subr.bf16.mxu0 0
        %560 = vmatpush1.bf16.msra.mxu0 %v538
        %561 = vmatprep.subr.bf16.mxu0 0
        %562 = vmatpush1.bf16.msra.mxu0 %v537
        %563 = vmatprep.subr.bf16.mxu0 0
        %564 = vmatpush1.bf16.msra.mxu0 %v536
        %565 = vmatprep.subr.bf16.mxu0 0
        %566 = vmatpush1.bf16.msra.mxu0 %v535
        %567 = vmatprep.subr.bf16.mxu0 0
        %568 = vmatpush2.bf16.msra.mxu0 0
        %569 = vmatprep.subr.bf16.mxu0 0
        %570 = vmatpush2.bf16.msra.mxu0 0
        %571 = vmatprep.subr.bf16.mxu0 0
        %572 = vmatpush2.bf16.msra.mxu0 0
        %573 = vmatprep.subr.bf16.mxu0 0
        %574 = vmatpush2.bf16.msra.mxu0 0
        %575 = vmatprep.subr.bf16.mxu0 0
        %576 = vmatpush2.bf16.msra.mxu0 0
        %577 = vmatprep.subr.bf16.mxu0 0
        %578 = vmatpush2.bf16.msra.mxu0 0
        %579 = vmatprep.subr.bf16.mxu0 0
        %580 = vmatpush2.bf16.msra.mxu0 0
        %581 = vmatprep.subr.bf16.mxu0 0
        %582 = vmatpush2.bf16.msra.mxu0 0
        %583 = vmatprep.mubr.bf16.mxu0 0
        %584 = vmatmul.mubr.bf16.gmra.mxu0 %v487
        %v585 = vpop.f32.mrf.mxu0
        %v586 = vadd.f32 %v378, %v585
        %v587 = vpop.f32.mrf.mxu0
        %v588 = vpop.f32.mrf.mxu0
        %v589 = vadd.f32 %v383, %v588
        %v590 = vpop.f32.mrf.mxu0
        %591 = vmatprep.mubr.bf16.mxu0 0
        %592 = vmatmul.mubr.bf16.gmra.mxu0 %v488
        %v593 = vpop.f32.mrf.mxu0
        %v594 = vadd.f32 %v388, %v593
        %v595 = vpop.f32.mrf.mxu0
        %v596 = vpop.f32.mrf.mxu0
        %v597 = vadd.f32 %v393, %v596
        %v598 = vpop.f32.mrf.mxu0
        %599 = vmatprep.mubr.bf16.mxu0 0
        %600 = vmatmul.mubr.bf16.gmra.mxu0 %v489
        %v601 = vpop.f32.mrf.mxu0
        %v602 = vadd.f32 %v398, %v601
        %v603 = vpop.f32.mrf.mxu0
        %v604 = vpop.f32.mrf.mxu0
        %v605 = vadd.f32 %v403, %v604
        %v606 = vpop.f32.mrf.mxu0
        %607 = vmatprep.mubr.bf16.mxu0 0
        %608 = vmatmul.mubr.bf16.gmra.mxu0 %v490
        %v609 = vpop.f32.mrf.mxu0
        %v610 = vadd.f32 %v408, %v609
        %v611 = vpop.f32.mrf.mxu0
        %v612 = vpop.f32.mrf.mxu0
        %v613 = vadd.f32 %v413, %v612
        %v614 = vpop.f32.mrf.mxu0
        %615 = vmatprep.mubr.bf16.mxu0 0
        %616 = vmatmul.mubr.bf16.gmra.mxu0 %v491
        %v617 = vpop.f32.mrf.mxu0
        %v618 = vadd.f32 %v418, %v617
        %v619 = vpop.f32.mrf.mxu0
        %v620 = vpop.f32.mrf.mxu0
        %v621 = vadd.f32 %v423, %v620
        %v622 = vpop.f32.mrf.mxu0
        %623 = vmatprep.mubr.bf16.mxu0 0
        %624 = vmatmul.mubr.bf16.gmra.mxu0 %v492
        %v625 = vpop.f32.mrf.mxu0
        %v626 = vadd.f32 %v428, %v625
        %v627 = vpop.f32.mrf.mxu0
        %v628 = vpop.f32.mrf.mxu0
        %v629 = vadd.f32 %v433, %v628
        %v630 = vpop.f32.mrf.mxu0
        %631 = vmatprep.mubr.bf16.mxu0 0
        %632 = vmatmul.mubr.bf16.gmra.mxu0 %v493
        %v633 = vpop.f32.mrf.mxu0
        %v634 = vadd.f32 %v438, %v633
        %v635 = vpop.f32.mrf.mxu0
        %v636 = vpop.f32.mrf.mxu0
        %v637 = vadd.f32 %v443, %v636
        %v638 = vpop.f32.mrf.mxu0
        %639 = vmatprep.mubr.bf16.mxu0 0
        %640 = vmatmul.mubr.bf16.gmra.mxu0 %v494
        %v641 = vpop.f32.mrf.mxu0
        %v642 = vadd.f32 %v448, %v641
        %v643 = vpop.f32.mrf.mxu0
        %v644 = vpop.f32.mrf.mxu0
        %v645 = vadd.f32 %v453, %v644
        %v646 = vpop.f32.mrf.mxu0
        %647 = vdwg.mxu0
        %vm648 = vcmp.ge.f32.partialorder %v586, 0.0
        %vm649 = vcmp.ge.f32.partialorder %v589, 0.0
        %vm650 = vcmp.ge.f32.partialorder %v594, 0.0
        %vm651 = vcmp.ge.f32.partialorder %v597, 0.0
        %vm652 = vcmp.ge.f32.partialorder %v602, 0.0
        %vm653 = vcmp.ge.f32.partialorder %v605, 0.0
        %vm654 = vcmp.ge.f32.partialorder %v610, 0.0
        %vm655 = vcmp.ge.f32.partialorder %v613, 0.0
        %vm656 = vcmp.ge.f32.partialorder %v618, 0.0
        %vm657 = vcmp.ge.f32.partialorder %v621, 0.0
        %vm658 = vcmp.ge.f32.partialorder %v626, 0.0
        %vm659 = vcmp.ge.f32.partialorder %v629, 0.0
        %vm660 = vcmp.ge.f32.partialorder %v634, 0.0
        %vm661 = vcmp.ge.f32.partialorder %v637, 0.0
        %vm662 = vcmp.ge.f32.partialorder %v642, 0.0
        %vm663 = vcmp.ge.f32.partialorder %v645, 0.0
        %v664 = vmul.f32 %v586, 0.1
        %v665 = vmul.f32 %v589, 0.1
        %v666 = vmul.f32 %v594, 0.1
        %v667 = vmul.f32 %v597, 0.1
        %v668 = vmul.f32 %v602, 0.1
        %v669 = vmul.f32 %v605, 0.1
        %v670 = vmul.f32 %v610, 0.1
        %v671 = vmul.f32 %v613, 0.1
        %v672 = vmul.f32 %v618, 0.1
        %v673 = vmul.f32 %v621, 0.1
        %v674 = vmul.f32 %v626, 0.1
        %v675 = vmul.f32 %v629, 0.1
        %v676 = vmul.f32 %v634, 0.1
        %v677 = vmul.f32 %v637, 0.1
        %v678 = vmul.f32 %v642, 0.1
        %v679 = vmul.f32 %v645, 0.1
        %v680 = vsel %vm648, %v586, %v664
        %v681 = vsel %vm649, %v589, %v665
        %v682 = vsel %vm650, %v594, %v666
        %v683 = vsel %vm651, %v597, %v667
        %v684 = vsel %vm652, %v602, %v668
        %v685 = vsel %vm653, %v605, %v669
        %v686 = vsel %vm654, %v610, %v670
        %v687 = vsel %vm655, %v613, %v671
        %v688 = vsel %vm656, %v618, %v672
        %v689 = vsel %vm657, %v621, %v673
        %v690 = vsel %vm658, %v626, %v674
        %v691 = vsel %vm659, %v629, %v675
        %v692 = vsel %vm660, %v634, %v676
        %v693 = vsel %vm661, %v637, %v677
        %v694 = vsel %vm662, %v642, %v678
        %v695 = vsel %vm663, %v645, %v679
        %v696 = vld [vmem:[%s3] sm:$0xff]
        %v697 = vld [vmem:[%s3 + $0x8] sm:$0xff]
        %v698 = vld [vmem:[%s3 + $0x10] sm:$0xff]
        %v699 = vld [vmem:[%s3 + $0x18] sm:$0xff]
        %v700 = vld [vmem:[%s3 + $0x20] sm:$0xff]
        %v701 = vld [vmem:[%s3 + $0x28] sm:$0xff]
        %v702 = vld [vmem:[%s3 + $0x30] sm:$0xff]
        %v703 = vld [vmem:[%s3 + $0x38] sm:$0xff]
        %v704 = vld [vmem:[%s3 + $0x40] sm:$0xff]
        %v705 = vld [vmem:[%s3 + $0x48] sm:$0xff]
        %v706 = vld [vmem:[%s3 + $0x50] sm:$0xff]
        %v707 = vld [vmem:[%s3 + $0x58] sm:$0xff]
        %v708 = vld [vmem:[%s3 + $0x60] sm:$0xff]
        %v709 = vld [vmem:[%s3 + $0x68] sm:$0xff]
        %v710 = vld [vmem:[%s3 + $0x70] sm:$0xff]
        %v711 = vld [vmem:[%s3 + $0x78] sm:$0xff]
        %713 = vset.pattern.permute.xlu0 0
        %714 = vperm.xlu0 %713, %v696
        %v715 = vpop.permute.xlu0 %714
        %718 = vset.pattern.permute.xlu0 0
        %719 = vperm.xlu0 %718, %v697
        %v720 = vpop.permute.xlu0 %719
        %723 = vset.pattern.permute.xlu0 0
        %724 = vperm.xlu0 %723, %v698
        %v725 = vpop.permute.xlu0 %724
        %728 = vset.pattern.permute.xlu0 0
        %729 = vperm.xlu0 %728, %v699
        %v730 = vpop.permute.xlu0 %729
        %733 = vset.pattern.permute.xlu0 0
        %734 = vperm.xlu0 %733, %v700
        %v735 = vpop.permute.xlu0 %734
        %738 = vset.pattern.permute.xlu0 0
        %739 = vperm.xlu0 %738, %v701
        %v740 = vpop.permute.xlu0 %739
        %743 = vset.pattern.permute.xlu0 0
        %744 = vperm.xlu0 %743, %v702
        %v745 = vpop.permute.xlu0 %744
        %748 = vset.pattern.permute.xlu0 0
        %749 = vperm.xlu0 %748, %v703
        %v750 = vpop.permute.xlu0 %749
        %753 = vset.pattern.permute.xlu0 0
        %754 = vperm.xlu0 %753, %v704
        %v755 = vpop.permute.xlu0 %754
        %758 = vset.pattern.permute.xlu0 0
        %759 = vperm.xlu0 %758, %v705
        %v760 = vpop.permute.xlu0 %759
        %763 = vset.pattern.permute.xlu0 0
        %764 = vperm.xlu0 %763, %v706
        %v765 = vpop.permute.xlu0 %764
        %768 = vset.pattern.permute.xlu0 0
        %769 = vperm.xlu0 %768, %v707
        %v770 = vpop.permute.xlu0 %769
        %773 = vset.pattern.permute.xlu0 0
        %774 = vperm.xlu0 %773, %v708
        %v775 = vpop.permute.xlu0 %774
        %778 = vset.pattern.permute.xlu0 0
        %779 = vperm.xlu0 %778, %v709
        %v780 = vpop.permute.xlu0 %779
        %783 = vset.pattern.permute.xlu0 0
        %784 = vperm.xlu0 %783, %v710
        %v785 = vpop.permute.xlu0 %784
        %788 = vset.pattern.permute.xlu0 0
        %789 = vperm.xlu0 %788, %v711
        %v790 = vpop.permute.xlu0 %789
        %v792 = vmul.f32 %v680, %v715
        %v793 = vmul.f32 %v681, %v720
        %v794 = vmul.f32 %v682, %v725
        %v795 = vmul.f32 %v683, %v730
        %v796 = vmul.f32 %v684, %v735
        %v797 = vmul.f32 %v685, %v740
        %v798 = vmul.f32 %v686, %v745
        %v799 = vmul.f32 %v687, %v750
        %v800 = vmul.f32 %v688, %v755
        %v801 = vmul.f32 %v689, %v760
        %v802 = vmul.f32 %v690, %v765
        %v803 = vmul.f32 %v691, %v770
        %v804 = vmul.f32 %v692, %v775
        %v805 = vmul.f32 %v693, %v780
        %v806 = vmul.f32 %v694, %v785
        %v807 = vmul.f32 %v695, %v790
        %v808 = vadd.f32 %v792, %v793
        %v809 = vadd.f32 %v808, %v794
        %v810 = vadd.f32 %v809, %v795
        %v811 = vadd.f32 %v810, %v796
        %v812 = vadd.f32 %v811, %v797
        %v813 = vadd.f32 %v812, %v798
        %v814 = vadd.f32 %v813, %v799
        %v815 = vadd.f32 %v814, %v800
        %v816 = vadd.f32 %v815, %v801
        %v817 = vadd.f32 %v816, %v802
        %v818 = vadd.f32 %v817, %v803
        %v819 = vadd.f32 %v818, %v804
        %v820 = vadd.f32 %v819, %v805
        %v821 = vadd.f32 %v820, %v806
        %v822 = vadd.f32 %v821, %v807
        %v823 = vrot.slane %v822, 4
        %v824 = vadd.f32 %v822, %v823
        %v825 = vrot.slane %v824, 2
        %v826 = vadd.f32 %v824, %v825
        %v827 = vrot.slane %v826, 1
        %v828 = vadd.f32 %v826, %v827
        %s829 = sld [smem:[#allocation2]]
        %v830 = vstv %s829
        %v831 = vadd.f32 %v828, %v830
        %v832 = vsub.f32 0.0, %v831
        %v833 = vmul.f32 %v832, 1.442695
        %v834 = vpow.pop %v833
        %v835 = vadd.f32 %v834, 1.0
        %v836 = vrcp.pop %v835
        %837 = vst [vmem:[%s325] sm:$0x1] %v836
        %s838 = sand.u32 %s138, 1
        %s839 = scalar_lea.sflag [#allocation5], %s838
        %s840 = sand.u32 %s138, 1
        %s841 = scalar_lea.vmem [#allocation4], %s840
        // Predicated region
        $region82: #{tpu_custom_call.1} parent=76 // pred_check
          %p842 = pneg %p148
        $region83: #{tpu_custom_call.1} parent=76 // pred_check_branch
          %844 = sbr.rel (%p842) target = $region85
        $region84: #{tpu_custom_call.1} parent=76 // pred_region
          %s846 = ssub.s32 16, 16
          %847 = vsyncadd %s839, %s846
          %s848 = smul.addr %s20, 16
          %s849 = scalar_lea.hbm %s5, %s848
          %s851 = sshll.u32 %s841, 4
          %s852 = int_to_ptr.vmem [resolvable:$true] %s851
          %854 = dma.vmem_to_hbm [thread:$0]  %s852, 16, %s849, %s839
        $region85: #{tpu_custom_call.1} parent=76 // pred_fallthru
          _
      $region77: #{tpu_custom_call.1} parent=5 // pred_fallthru
        _
      %p855 = scmp.le.s32.totalorder 2, %s15
      // Predicated region
      $region86: #{tpu_custom_call.1} parent=5 // pred_check
        %p856 = pneg %p855
      $region87: #{tpu_custom_call.1} parent=5 // pred_check_branch
        %858 = sbr.rel (%p856) target = $region89
      $region88: #{tpu_custom_call.1} parent=5 // pred_region
        %s859 = ssub.s32 %s15, 2
        // Predicated region
        $region90: #{tpu_custom_call.1} parent=88 // pred_check
          %p860 = pneg %p154
        $region91: #{tpu_custom_call.1} parent=88 // pred_check_branch
          %862 = sbr.rel (%p860) target = $region93
        $region92: #{tpu_custom_call.1} parent=88 // pred_region
          %s863 = sand.u32 %s139, 1
          %s864 = scalar_lea.sflag [#allocation5], %s863
          %s865 = sand.u32 %s139, 1
          %s866 = scalar_lea.vmem [#allocation4], %s865
          %867 = dma.done %s864, 16
        $region93: #{tpu_custom_call.1} parent=88 // pred_fallthru
          _
      $region89: #{tpu_custom_call.1} parent=5 // pred_fallthru
        _
    $region6: #{tpu_custom_call.1} parent=1 // loop_footer
      %s19 = sadd.s32 1, %s15
    $region7: #{tpu_custom_call.1} parent=1 // loop_footer_branch
      %14 = sbr.rel target = $region3
    $region8: #{tpu_custom_call.1} parent=1 // loop_exit
      _
    %868 = vsyncpa [#allocation5], 1
    %s869 = scalar_lea.sflag [#allocation5], 1
    %870 = vsyncpa %s869, 1

</llo_original>
